<compile_context>
chip_gen: v6e
topology: v6e:2x2x1
jax: 0.10.0
libtpu: 0.0.40
codegen_flags: <defaults>
</compile_context>

<pallas_src>
import functools

import jax
import jax.numpy as jnp
from jax.experimental import pallas as pl
from jax.experimental.pallas import tpu as pltpu


def _label_smoothing_kernel(pred_ref, tgt_ref, out_ref, *,
                            smooth_val, coeff, total_rows, block_rows):
    i = pl.program_id(0)

    pred = pred_ref[...].astype(jnp.float32)                     # (TB, C) f32
    TB, C = pred.shape

    # log-softmax pieces (reductions along the lane/class axis -> XLU).
    m = jnp.max(pred, axis=-1, keepdims=True)                    # (TB, 1)
    shifted = pred - m
    lse = jnp.log(jnp.sum(jnp.exp(shifted), axis=-1, keepdims=True))  # (TB, 1)

    # Smoothed cross-entropy without materializing true_dist / onehot:
    #   loss_row = lse - [smooth*sum(shifted) + (conf - smooth)*shifted[target]]
    # Only iota + cmp + select per element; the weighting is done on per-row
    # scalars after two lane reductions.
    col = jax.lax.broadcasted_iota(jnp.int32, (TB, C), 1)
    tgt = tgt_ref[...]                                            # (TB, 1) int32
    s_sum = jnp.sum(shifted, axis=-1, keepdims=True)              # (TB, 1)
    t_sum = jnp.sum(jnp.where(col == tgt, shifted, 0.0),
                    axis=-1, keepdims=True)                       # (TB, 1)
    per_row = lse - (smooth_val * s_sum + coeff * t_sum)          # (TB, 1)

    # Mask padded rows of a remainder tile (they may hold garbage / NaN) so
    # they contribute exactly 0 to the final sum.
    row = i * block_rows + jax.lax.broadcasted_iota(jnp.int32, (TB, 1), 0)
    out_ref[...] = jnp.where(row < total_rows, per_row, 0.0)


def _sublane_multiple(itemsize):
    # Sub-32-bit dtypes pack along sublanes: bf16 -> 16 rows/vreg, int8 -> 32.
    return {4: 8, 2: 16, 1: 32}.get(itemsize, 8)


def _default_vmem_limit_bytes():
    """Generation-aware scoped-VMEM request: half of physical, capped at 96 MiB.

    ~32 MiB on v7x (64 MiB physical), ~64 MiB on v5e/v6e (128 MiB physical).
    """
    cap = 128 << 20
    try:
        info = pltpu.get_tpu_info()
        cap = int(getattr(info, "vmem_capacity_bytes", cap))
    except Exception:
        pass
    return int(min(cap // 2, 96 << 20))


def _choose_block_rows(B, C, itemsize, budget_bytes):
    """Largest batch tile fitting the VMEM budget, rounded to the sublane multiple.

    Per-row cost model: 2x pred tile (double-buffered, input dtype) +
    2x (row,1) int32 target tile + ~3 live f32 (row, C) temporaries inside the
    kernel body (upcast/shifted, exp, select) + the f32 output row.
    """
    per_row = 2 * C * itemsize + 2 * 4 + 3 * C * 4 + 2 * 4
    tb = max(1, budget_bytes // per_row)
    if tb >= B:
        return B                                   # full batch in one block
    sub = _sublane_multiple(itemsize)
    return min(B, max(sub, (tb // sub) * sub))


def label_smoothing_loss(pred, target, *, classes, smoothing=0.0,
                         block_rows=None, vmem_limit_bytes=None):
    """pred: (B, C) float; target: (B,) int. Returns scalar f32 loss."""
    B, C = pred.shape
    assert C == classes
    confidence = 1.0 - smoothing
    # Guard C == 1 (degenerate): avoid a trace-time division by zero.
    smooth_val = smoothing / (C - 1) if C > 1 else 0.0
    coeff = confidence - smooth_val
    tgt2d = target.astype(jnp.int32).reshape(B, 1)

    itemsize = jnp.dtype(pred.dtype).itemsize
    if vmem_limit_bytes is None:
        vmem_limit_bytes = _default_vmem_limit_bytes()
    if block_rows is None:
        # Leave ~20% headroom under the requested scoped-VMEM limit.
        block_rows = _choose_block_rows(B, C, itemsize,
                                        int(vmem_limit_bytes * 0.8))
    else:
        sub = _sublane_multiple(itemsize)
        block_rows = B if block_rows >= B else min(
            B, max(sub, (block_rows // sub) * sub))

    num_tiles = pl.cdiv(B, block_rows)
    padded_rows = num_tiles * block_rows

    kernel = functools.partial(
        _label_smoothing_kernel,
        smooth_val=float(smooth_val),
        coeff=float(coeff),
        total_rows=B,
        block_rows=block_rows,
    )

    grid_spec = pltpu.PrefetchScalarGridSpec(
        num_scalar_prefetch=0,
        grid=(num_tiles,),
        in_specs=[
            # TODO(synk): add pipeline_mode=pl.Buffered(3) here if profiling
            # shows exposed DMA when large C forces small block_rows.
            pl.BlockSpec((block_rows, C), lambda i: (i, 0)),
            pl.BlockSpec((block_rows, 1), lambda i: (i, 0)),
        ],
        # Distinct output block per grid step -> no cross-step accumulation,
        # safe to shard the grid across TensorCores (v7x megacore).
        out_specs=pl.BlockSpec((block_rows, 1), lambda i: (i, 0)),
    )

    per_row = pl.pallas_call(
        kernel,
        out_shape=jax.ShapeDtypeStruct((padded_rows, 1), jnp.float32),
        grid_spec=grid_spec,
        compiler_params=pltpu.CompilerParams(
            dimension_semantics=("parallel",),
            vmem_limit_bytes=int(vmem_limit_bytes),
        ),
    )(pred, tgt2d)

    # Padded rows are exactly 0, so summing everything and dividing by the
    # true batch size reproduces the reference mean.
    return jnp.sum(per_row) / B


def _reference(pred, target, *, classes, smoothing):
    confidence = 1.0 - smoothing
    logp = jax.nn.log_softmax(pred.astype(jnp.float32), axis=-1)
    true_dist = jnp.full_like(logp, smoothing / (classes - 1))
    true_dist = true_dist.at[jnp.arange(pred.shape[0]), target].set(confidence)
    return jnp.mean(jnp.sum(-true_dist * logp, axis=-1))


if __name__ == "__main__":
    key = jax.random.PRNGKey(0)
    B, C = 10, 12           # B=10 with block_rows=8 exercises a masked remainder tile
    smoothing = 0.1

    k_pred, k_tgt = jax.random.split(key)
    pred = jax.random.normal(k_pred, (B, C), dtype=jnp.float32)
    target = jax.random.randint(k_tgt, (B,), 0, C, dtype=jnp.int32)

    # Gridded path: 2 batch tiles (8 + remainder of 2 masked rows).
    loss = label_smoothing_loss(pred, target, classes=C, smoothing=smoothing,
                                block_rows=8)
    jax.block_until_ready(loss)
    ref = _reference(pred, target, classes=C, smoothing=smoothing)
    assert jnp.allclose(loss, ref, atol=1e-5, rtol=1e-5), (loss, ref)

    # Auto-tiled path (single full-batch block here) with a different smoothing.
    loss2 = label_smoothing_loss(pred, target, classes=C, smoothing=0.0)
    jax.block_until_ready(loss2)
    ref2 = _reference(pred, target, classes=C, smoothing=0.0)
    assert jnp.allclose(loss2, ref2, atol=1e-5, rtol=1e-5), (loss2, ref2)

    # bf16 input path (upcast happens in-kernel; sublane multiple = 16).
    loss3 = label_smoothing_loss(pred.astype(jnp.bfloat16), target,
                                 classes=C, smoothing=smoothing)
    jax.block_until_ready(loss3)
    ref3 = _reference(pred.astype(jnp.bfloat16), target, classes=C,
                      smoothing=smoothing)
    assert jnp.allclose(loss3, ref3, atol=5e-3, rtol=5e-3), (loss3, ref3)

    print("KERNEL_OK")
</pallas_src>

<mosaic_0001>
module attributes {stable_mosaic.version = 11 : i64} {
  func.func @_label_smoothing_kernel(%arg0: i32, %arg1: memref<8x12xf32, #tpu.memory_space<vmem>>, %arg2: memref<8x1xi32, #tpu.memory_space<vmem>>, %arg3: memref<8x1xf32, #tpu.memory_space<vmem>>) attributes {dimension_semantics = [#tpu.dimension_semantics<parallel>], iteration_bounds = array<i64: 2>, scalar_prefetch = 0 : i64, scratch_operands = 0 : i64, tpu.core_type = #tpu.core_type<tc>, window_params = [{transform_indices = @transform_0, window_bounds = array<i64: 8, 12>}, {transform_indices = @transform_1, window_bounds = array<i64: 8, 1>}, {transform_indices = @transform_2, window_bounds = array<i64: 8, 1>}]} {
    %c0 = arith.constant 0 : index
    %c0_0 = arith.constant 0 : index
    %0 = vector.load %arg1[%c0, %c0_0] : memref<8x12xf32, #tpu.memory_space<vmem>>, vector<8x12xf32>
    %cst = arith.constant dense<0xFF800000> : vector<8xf32>
    %1 = vector.multi_reduction <maximumf>, %0, %cst [1] : vector<8x12xf32> to vector<8xf32>
    %2 = vector.shape_cast %1 : vector<8xf32> to vector<8x1xf32>
    %3 = vector.broadcast %2 : vector<8x1xf32> to vector<8x12xf32>
    %4 = arith.subf %0, %3 : vector<8x12xf32>
    %5 = math.exp %4 : vector<8x12xf32>
    %cst_1 = arith.constant dense<0.000000e+00> : vector<8xf32>
    %6 = vector.multi_reduction <add>, %5, %cst_1 [1] : vector<8x12xf32> to vector<8xf32>
    %7 = vector.shape_cast %6 : vector<8xf32> to vector<8x1xf32>
    %8 = math.log %7 : vector<8x1xf32>
    %9 = tpu.iota {dimensions = array<i32: 1>} : vector<8x12xi32>
    %c0_2 = arith.constant 0 : index
    %c0_3 = arith.constant 0 : index
    %10 = vector.load %arg2[%c0_2, %c0_3] : memref<8x1xi32, #tpu.memory_space<vmem>>, vector<8x1xi32>
    %cst_4 = arith.constant dense<0.000000e+00> : vector<8xf32>
    %11 = vector.multi_reduction <add>, %4, %cst_4 [1] : vector<8x12xf32> to vector<8xf32>
    %12 = vector.shape_cast %11 : vector<8xf32> to vector<8x1xf32>
    %13 = vector.broadcast %10 : vector<8x1xi32> to vector<8x12xi32>
    %14 = arith.cmpi eq, %9, %13 : vector<8x12xi32>
    %cst_5 = arith.constant 0.000000e+00 : f32
    %15 = vector.broadcast %cst_5 : f32 to vector<8x12xf32>
    %16 = arith.select %14, %4, %15 : vector<8x12xi1>, vector<8x12xf32>
    %cst_6 = arith.constant dense<0.000000e+00> : vector<8xf32>
    %17 = vector.multi_reduction <add>, %16, %cst_6 [1] : vector<8x12xf32> to vector<8xf32>
    %18 = vector.shape_cast %17 : vector<8xf32> to vector<8x1xf32>
    %cst_7 = arith.constant 0.0090909088 : f32
    %19 = vector.broadcast %cst_7 : f32 to vector<8x1xf32>
    %20 = arith.mulf %19, %12 : vector<8x1xf32>
    %cst_8 = arith.constant 0.890909075 : f32
    %21 = vector.broadcast %cst_8 : f32 to vector<8x1xf32>
    %22 = arith.mulf %21, %18 : vector<8x1xf32>
    %23 = arith.addf %20, %22 : vector<8x1xf32>
    %24 = arith.subf %8, %23 : vector<8x1xf32>
    %c8_i32 = arith.constant 8 : i32
    %25 = arith.muli %arg0, %c8_i32 : i32
    %26 = tpu.iota {dimensions = array<i32: 0>} : vector<8x1xi32>
    %27 = vector.broadcast %25 : i32 to vector<8x1xi32>
    %28 = arith.addi %27, %26 : vector<8x1xi32>
    %c10_i32 = arith.constant 10 : i32
    %29 = vector.broadcast %c10_i32 : i32 to vector<8x1xi32>
    %30 = arith.cmpi slt, %28, %29 : vector<8x1xi32>
    %cst_9 = arith.constant 0.000000e+00 : f32
    %31 = vector.broadcast %cst_9 : f32 to vector<8x1xf32>
    %32 = arith.select %30, %24, %31 : vector<8x1xi1>, vector<8x1xf32>
    %c0_10 = arith.constant 0 : index
    %c0_11 = arith.constant 0 : index
    %33 = vector.load %arg3[%c0_10, %c0_11] : memref<8x1xf32, #tpu.memory_space<vmem>>, vector<8x1xf32>
    tpu.vector_store %arg3[%c0_10, %c0_11], %32 {strides = array<i32>} : memref<8x1xf32, #tpu.memory_space<vmem>>, vector<8x1xf32>,
    return
  }
  func.func @transform_0(%arg0: i32) -> (i32, i32) {
    %c0_i32 = arith.constant 0 : i32
    %c0_i32_0 = arith.constant 0 : i32
    return %arg0, %c0_i32 : i32, i32
  }
  func.func @transform_1(%arg0: i32) -> (i32, i32) {
    %c0_i32 = arith.constant 0 : i32
    %c0_i32_0 = arith.constant 0 : i32
    return %arg0, %c0_i32 : i32, i32
  }
  func.func @transform_2(%arg0: i32) -> (i32, i32) {
    %c0_i32 = arith.constant 0 : i32
    %c0_i32_0 = arith.constant 0 : i32
    return %arg0, %c0_i32 : i32, i32
  }
}

</mosaic_0001>

<llo_original>
// kernel: tpu_custom_call.1
$region0: #{tpu_custom_call.1}
  #allocation0 [shape = 'u32[]', space=smem, size = 0x4, offset = 0x4, fixed_abs, tag = 'smem constant byte address 0x4 - core index']
  #allocation1 [shape = 'u32[144,128]{1,0:T(1,128)}', space=vmem, size = 0x12000, scoped, tag = 'internal scratch']
  %s0 = inlined_call_operand.vmem [shape: f32[10,12], index: 0, kind: input, shape index: {}]
  %s1 = inlined_call_operand.vmem [shape: s32[10,1], index: 1, kind: input, shape index: {}]
  %s2 = inlined_call_operand.vmem [shape: f32[16,1], index: 2, kind: output, shape index: {}]
  %s3 = sld [smem:[#allocation0]]
  $region41: #{tpu_custom_call.1} parent=0
    _
  %s5 = ssub.s32 1, %s3
  %s6 = scalar_select 0, %s5, %s3
  loop: start=0, step=1, limit=4
  $region2: #{tpu_custom_call.1} parent=0 // loop_pre_header
    _
  $region3: #{tpu_custom_call.1} parent=0 // loop_header
    %s8 = sphi 0, %s12
    %p9 = scmp.ge.s32.totalorder %s8, 4
    %s18 = sphi 0, %s20
    %s21 = sphi 0, %s18
    %s22 = sphi 0, %s21
    %s38 = sphi 0, %s22
    %s44 = sphi 0, %s46
    %s47 = sphi 0, %s44
    %s48 = sphi 0, %s47
    %s64 = sphi 0, %s48
    %s70 = sphi 0, %s72
    %s73 = sphi 0, %s70
    %s74 = sphi 0, %s73
    %s90 = sphi 0, %s74
  $region4: #{tpu_custom_call.1} parent=0 // loop_header_branch
    %11 = sbr.rel (%p9) target = $region8
  $region5: #{tpu_custom_call.1} parent=0 // loop_body
    %s13 = ssub.s32 %s8, 1
    %s14 = ssub.s32 %s8, 2
    %s15 = sadd.s32 %s8, 1
    %s16 = ssub.s32 %s8, %s15
    %p17 = scmp.eq.s32.totalorder %s16, 0
    %s19 = sadd.s32 %s18, 1
    %s20 = scalar_select %p17, %s18, %s19
    %p23 = pneg %p17
    %p24 = scmp.eq.s32.totalorder %s8, 1
    %p25 = por %p23, %p24
    %p26 = scmp.ne.s32.totalorder %s18, %s21
    %p27 = scmp.eq.s32.totalorder %s8, 0
    %p28 = por %p26, %p27
    %p29 = scmp.ne.s32.totalorder %s18, %s21
    %p30 = scmp.eq.s32.totalorder %s13, 1
    %p31 = por %p29, %p30
    %p32 = scmp.ne.s32.totalorder %s21, %s22
    %p33 = scmp.eq.s32.totalorder %s13, 0
    %p34 = por %p32, %p33
    %p35 = scmp.ne.s32.totalorder %s21, %s22
    %p36 = scmp.eq.s32.totalorder %s14, 1
    %p37 = por %p35, %p36
    %p39 = scmp.ne.s32.totalorder %s22, %s38
    %p40 = scmp.eq.s32.totalorder %s14, 0
    %p41 = por %p39, %p40
    %s42 = ssub.s32 %s8, %s15
    %p43 = scmp.eq.s32.totalorder %s42, 0
    %s45 = sadd.s32 %s44, 1
    %s46 = scalar_select %p43, %s44, %s45
    %p49 = pneg %p43
    %p50 = scmp.eq.s32.totalorder %s8, 1
    %p51 = por %p49, %p50
    %p52 = scmp.ne.s32.totalorder %s44, %s47
    %p53 = scmp.eq.s32.totalorder %s8, 0
    %p54 = por %p52, %p53
    %p55 = scmp.ne.s32.totalorder %s44, %s47
    %p56 = scmp.eq.s32.totalorder %s13, 1
    %p57 = por %p55, %p56
    %p58 = scmp.ne.s32.totalorder %s47, %s48
    %p59 = scmp.eq.s32.totalorder %s13, 0
    %p60 = por %p58, %p59
    %p61 = scmp.ne.s32.totalorder %s47, %s48
    %p62 = scmp.eq.s32.totalorder %s14, 1
    %p63 = por %p61, %p62
    %p65 = scmp.ne.s32.totalorder %s48, %s64
    %p66 = scmp.eq.s32.totalorder %s14, 0
    %p67 = por %p65, %p66
    %s68 = ssub.s32 %s8, %s15
    %p69 = scmp.eq.s32.totalorder %s68, 0
    %s71 = sadd.s32 %s70, 1
    %s72 = scalar_select %p69, %s70, %s71
    %p75 = pneg %p69
    %p76 = scmp.eq.s32.totalorder %s8, 1
    %p77 = por %p75, %p76
    %p78 = scmp.ne.s32.totalorder %s70, %s73
    %p79 = scmp.eq.s32.totalorder %s8, 0
    %p80 = por %p78, %p79
    %p81 = scmp.ne.s32.totalorder %s70, %s73
    %p82 = scmp.eq.s32.totalorder %s13, 1
    %p83 = por %p81, %p82
    %p84 = scmp.ne.s32.totalorder %s73, %s74
    %p85 = scmp.eq.s32.totalorder %s13, 0
    %p86 = por %p84, %p85
    %p87 = scmp.ne.s32.totalorder %s73, %s74
    %p88 = scmp.eq.s32.totalorder %s14, 1
    %p89 = por %p87, %p88
    %p91 = scmp.ne.s32.totalorder %s74, %s90
    %p92 = scmp.eq.s32.totalorder %s14, 0
    %p93 = por %p91, %p92
    %p94 = scmp.le.s32.totalorder 1, %s8
    %p95 = scmp.lt.s32.totalorder %s8, 3
    %p96 = pnand %p94, %p95
    %p97 = pneg %p96
    // Predicated region
    $region9: #{tpu_custom_call.1} parent=5 // pred_check
      _
    $region10: #{tpu_custom_call.1} parent=5 // pred_check_branch
      %99 = sbr.rel (%p96) target = $region12
    $region11: #{tpu_custom_call.1} parent=5 // pred_region
      %s100 = ssub.s32 %s8, 1
    $region12: #{tpu_custom_call.1} parent=5 // pred_fallthru
      _
    %p101 = scmp.lt.s32.totalorder %s8, 2
    // Predicated region
    $region13: #{tpu_custom_call.1} parent=5 // pred_check
      %p102 = pneg %p101
    $region14: #{tpu_custom_call.1} parent=5 // pred_check_branch
      %104 = sbr.rel (%p102) target = $region16
    $region15: #{tpu_custom_call.1} parent=5 // pred_region
      // Predicated region
      $region17: #{tpu_custom_call.1} parent=15 // pred_check
        %p105 = pneg %p28
      $region18: #{tpu_custom_call.1} parent=15 // pred_check_branch
        %107 = sbr.rel (%p105) target = $region20
      $region19: #{tpu_custom_call.1} parent=15 // pred_region
        %p108 = scmp.lt.s32.totalorder %s8, 1
        %s109 = scalar_select %p108, %s8, 1
        %s110 = smul.addr %s109, 8
        %s111 = scalar_lea.vmem %s0, %s110
      $region20: #{tpu_custom_call.1} parent=15 // pred_fallthru
        _
      // Predicated region
      $region21: #{tpu_custom_call.1} parent=15 // pred_check
        %p112 = pneg %p54
      $region22: #{tpu_custom_call.1} parent=15 // pred_check_branch
        %114 = sbr.rel (%p112) target = $region24
      $region23: #{tpu_custom_call.1} parent=15 // pred_region
        %p115 = scmp.lt.s32.totalorder %s8, 1
        %s116 = scalar_select %p115, %s8, 1
        %s117 = smul.addr %s116, 8
        %s118 = scalar_lea.vmem %s1, %s117
      $region24: #{tpu_custom_call.1} parent=15 // pred_fallthru
        _
    $region16: #{tpu_custom_call.1} parent=5 // pred_fallthru
      _
    %p119 = scmp.le.s32.totalorder 1, %s8
    %p120 = scmp.lt.s32.totalorder %s8, 3
    %p121 = pnand %p119, %p120
    %p122 = pneg %p121
    // Predicated region
    $region25: #{tpu_custom_call.1} parent=5 // pred_check
      _
    $region26: #{tpu_custom_call.1} parent=5 // pred_check_branch
      %124 = sbr.rel (%p121) target = $region28
    $region27: #{tpu_custom_call.1} parent=5 // pred_region
      %s125 = ssub.s32 %s8, 1
      %p126 = scmp.lt.s32.totalorder %s13, 1
      %s127 = scalar_select %p126, %s13, 1
      %s128 = smul.addr %s127, 8
      %s129 = scalar_lea.vmem %s0, %s128
      %p130 = pneg %p34
      %p131 = pneg %p31
      %p132 = scmp.lt.s32.totalorder %s13, 1
      %s133 = scalar_select %p132, %s13, 1
      %s134 = smul.addr %s133, 8
      %s135 = scalar_lea.vmem %s1, %s134
      %p136 = pneg %p60
      %p137 = pneg %p57
      %p138 = pneg %p86
      %p139 = pneg %p83
      %p140 = scmp.lt.s32.totalorder %s13, 1
      %s141 = scalar_select %p140, %s13, 1
      %s142 = smul.addr %s141, 8
      %s143 = scalar_lea.vmem %s2, %s142
      %p144 = scmp.lt.s32.totalorder %s13, 1
      %s145 = scalar_select %p144, %s13, 1
      %s146 = smul.addr %s145, 8
      %s147 = scalar_lea.vmem %s0, %s146
      %p148 = scmp.lt.s32.totalorder %s13, 1
      %s149 = scalar_select %p148, %s13, 1
      %s150 = smul.addr %s149, 8
      %s151 = scalar_lea.vmem %s1, %s150
      %p152 = scmp.lt.s32.totalorder %s13, 1
      %s153 = scalar_select %p152, %s13, 1
      %s154 = smul.addr %s153, 8
      %s155 = scalar_lea.vmem %s2, %s154
      %v156 = vld [vmem:[%s147] sm:$0xff]
      %vm157 = vcmask 97280
      %v158 = vsel %vm157, %v156, -inf
      %159 = vmax.xlane.f32.xlu0 %v158
      %v160 = vpop.xlane.xlu0 %159
      %v161 = vsub.f32 %v156, %v160
      %v162 = vmul.f32 %v161, 1.442695
      %v163 = vpow.pop %v162
      %v164 = vsel %vm157, %v163, 0.0
      %165 = vadd.xlane.f32.xlu0 %v164
      %v166 = vpop.xlane.xlu0 %165
      %v167 = vlog2.pop %v166
      %v168 = vmul.f32 %v167, 0.6931472
      %v169 = vlaneseq
      %v170 = vand.u32 %v169, 127
      %v171 = vld [vmem:[%s151] sm:$0xff]
      %v172 = vsel %vm157, %v161, 0.0
      %173 = vadd.xlane.f32.xlu0 %v172
      %v174 = vpop.xlane.xlu0 %173
      %175 = vset.pattern.permute.xlu0 0
      %176 = vperm.xlu0 %175, %v171
      %v177 = vpop.permute.xlu0 %176
      %vm178 = vcmp.eq.s32.totalorder %v170, %v177
      %v179 = vsel %vm178, %v161, 0.0
      %v180 = vsel %vm157, %v179, 0.0
      %181 = vadd.xlane.f32.xlu0 %v180
      %v182 = vpop.xlane.xlu0 %181
      %v183 = vmul.f32 %v174, 0.009090909
      %v184 = vmul.f32 %v182, 0.8909091
      %v185 = vadd.f32 %v183, %v184
      %v186 = vsub.f32 %v168, %v185
      %s187 = smul.u32 %s13, 8
      %v188 = vlaneseq
      %v189 = vshrl.u32 %v188, 7
      %v190 = vstv %s187
      %v191 = vadd.s32 %v190, %v189
      %vm192 = vcmp.lt.s32.totalorder %v191, 10
      %v193 = vsel %vm192, %v186, 0.0
      %vm194 = vcmask 7168
      %195 = vst.msk [vmem:[%s155] sm:$0xff] %vm194, %v193
      %p196 = scmp.lt.s32.totalorder %s13, 1
      %s197 = scalar_select %p196, %s13, 1
      %s198 = smul.addr %s197, 8
      %s199 = scalar_lea.vmem %s2, %s198
      // Predicated region
      $region29: #{tpu_custom_call.1} parent=27 // pred_check
        %p200 = pneg %p83
      $region30: #{tpu_custom_call.1} parent=27 // pred_check_branch
        %202 = sbr.rel (%p200) target = $region32
      $region31: #{tpu_custom_call.1} parent=27 // pred_region
        _
      $region32: #{tpu_custom_call.1} parent=27 // pred_fallthru
        _
    $region28: #{tpu_custom_call.1} parent=5 // pred_fallthru
      _
    %p203 = scmp.le.s32.totalorder 2, %s8
    // Predicated region
    $region33: #{tpu_custom_call.1} parent=5 // pred_check
      %p204 = pneg %p203
    $region34: #{tpu_custom_call.1} parent=5 // pred_check_branch
      %206 = sbr.rel (%p204) target = $region36
    $region35: #{tpu_custom_call.1} parent=5 // pred_region
      %s207 = ssub.s32 %s8, 2
      // Predicated region
      $region37: #{tpu_custom_call.1} parent=35 // pred_check
        %p208 = pneg %p89
      $region38: #{tpu_custom_call.1} parent=35 // pred_check_branch
        %210 = sbr.rel (%p208) target = $region40
      $region39: #{tpu_custom_call.1} parent=35 // pred_region
        %p211 = scmp.lt.s32.totalorder %s14, 1
        %s212 = scalar_select %p211, %s14, 1
        %s213 = smul.addr %s212, 8
        %s214 = scalar_lea.vmem %s2, %s213
      $region40: #{tpu_custom_call.1} parent=35 // pred_fallthru
        _
    $region36: #{tpu_custom_call.1} parent=5 // pred_fallthru
      _
  $region6: #{tpu_custom_call.1} parent=0 // loop_footer
    %s12 = sadd.s32 1, %s8
  $region7: #{tpu_custom_call.1} parent=0 // loop_footer_branch
    %7 = sbr.rel target = $region3
  $region8: #{tpu_custom_call.1} parent=0 // loop_exit
    _

</llo_original>
